<compile_context>
chip_gen: v7x
topology: tpu7x:2x2x1
jax: 0.10.0
libtpu: 0.0.40
codegen_flags: <defaults>
</compile_context>

<pallas_src>
import numpy as np
import jax
import jax.numpy as jnp
from jax.experimental import pallas as pl

# ----------------------------------------------------------------------------
# Config: StockBlockLayer(time_step=T, unit=N, multi_layer=M, order=K, modes=MODES)
# ----------------------------------------------------------------------------
B = 2          # batch
N_NODE = 8     # unit (graph nodes)
T = 8          # time_step
MULTI = 2      # multi_layer
K_ORDER = 4    # order
MODES = 2      # FourierBlock modes
MT = MULTI * T


def get_frequency_modes(seq_len, modes=4, mode_select_method='random'):
    modes = min(modes, seq_len // 2)
    if mode_select_method == 'random':
        index = list(range(0, seq_len // 2))
        np.random.shuffle(index)
        index = index[:modes]
    else:
        index = list(range(0, modes))
    index.sort()
    return index


# ----------------------------------------------------------------------------
# Deterministic synthetic parameters (torch-equivalent shapes / distributions)
# ----------------------------------------------------------------------------
def init_params(key, index):
    ks = jax.random.split(key, 7)
    modes = len(index)

    # StockBlockLayer.weight : (1, order, 1, T, M*T), xavier_normal_ -> stored (K, T, MT)
    fan_in = K_ORDER * 1 * T * MT
    fan_out = 1 * 1 * T * MT
    std = float(np.sqrt(2.0 / (fan_in + fan_out)))
    weight = std * jax.random.normal(ks[0], (K_ORDER, T, MT), jnp.float32)

    # FourierBlock.weights1 : complex (node, in, out, modes); scale * U[0,1) Re / Im
    scale = 1.0 / (K_ORDER * K_ORDER)
    w_re = scale * jax.random.uniform(ks[1], (N_NODE, K_ORDER, K_ORDER, modes), jnp.float32)
    w_im = scale * jax.random.uniform(ks[2], (N_NODE, K_ORDER, K_ORDER, modes), jnp.float32)

    def linear(k, n_in, n_out):
        kw, kb = jax.random.split(k)
        bound = 1.0 / np.sqrt(n_in)
        w = jax.random.uniform(kw, (n_in, n_out), jnp.float32, -bound, bound)  # W.T layout
        b = jax.random.uniform(kb, (1, n_out), jnp.float32, -bound, bound)
        return w, b

    wf, bf = linear(ks[3], MT, MT)      # forecast
    wfr, bfr = linear(ks[4], MT, T)     # forecast_result
    wbc, bbc = linear(ks[5], MT, T)     # backcast
    wbs, bbs = linear(ks[6], T, T)      # backcast_short_cut
    # series_decomp_multi.layer = Linear(1,1): softmax over a size-1 axis is exactly 1,
    # so the parameter cannot affect the output and is omitted.
    return dict(weight=weight, w_re=w_re, w_im=w_im,
                wf=wf, bf=bf, wfr=wfr, bfr=bfr, wbc=wbc, bbc=bbc, wbs=wbs, bbs=bbs)


# ----------------------------------------------------------------------------
# Host-side constant preparation: fold heads, block-diagonalize, pack one slab
# ----------------------------------------------------------------------------
def _pack_rows(entries, width):
    """Stack 2-D f32 constants into one (rows, width) slab; each block row-padded to 8."""
    blocks, layout, off = [], {}, 0
    for name, a in entries:
        a = np.asarray(a, np.float32)
        r, c = a.shape
        rp = -(-r // 8) * 8
        blk = np.zeros((rp, width), np.float32)
        blk[:r, :c] = a
        blocks.append(blk)
        layout[name] = (off, r, c)
        off += rp
    return np.concatenate(blocks, axis=0), layout


def _build_constant_slab(params, index, batch):
    weight = np.asarray(params['weight'], np.float64)          # (K, T, L)
    K, Tt, L = weight.shape
    w_re = np.asarray(params['w_re'], np.float64)              # (N, K, K, modes)
    w_im = np.asarray(params['w_im'], np.float64)
    N = w_re.shape[0]
    modes = len(index)
    two_m = 2 * modes
    km = K * two_m                       # xft width per batch element
    xw_width = batch * km
    hd_width = batch * 2 * Tt            # [forecast-pre | backcast-pre] for all batches

    wf = np.asarray(params['wf'], np.float64)
    bf = np.asarray(params['bf'], np.float64)
    wfr = np.asarray(params['wfr'], np.float64)
    bfr = np.asarray(params['bfr'], np.float64)
    wbc = np.asarray(params['wbc'], np.float64)
    bbc = np.asarray(params['bbc'], np.float64)
    wbs = np.asarray(params['wbs'], np.float64)
    bbs = np.asarray(params['bbs'], np.float64)

    # Fold forecast -> forecast_result into a single matrix / bias (host, f64).
    w_fc = wf @ wfr                                            # (L, T)
    b_fc = bf @ wfr + bfr                                      # (1, T)

    # (a) Forward real DFT of a length-L signal at the selected bins, packed [Re | Im].
    t = np.arange(L, dtype=np.float64)
    ang_f = 2.0 * np.pi * np.outer(t, np.asarray(index, np.float64)) / L   # (L, modes)
    cs = np.concatenate([np.cos(ang_f), -np.sin(ang_f)], axis=1)           # (L, 2m)

    # (b) FWC: spectral weight composed with (selected-mode rDFT | folded heads),
    #     block over batch so gf (cols (b,k,t)) @ FWC yields xft and the gw-part of
    #     both heads in ONE matmul.
    w3 = weight.reshape(K * Tt, L)
    fw_fc = w3 @ w_fc                                          # (K*T, T): sum_k gw_k -> fc
    fw_bc = w3 @ wbc                                           # (K*T, T): sum_k gw_k -> bc
    fw_xft = np.zeros((K * Tt, km))
    for k in range(K):
        fw_xft[k * Tt:(k + 1) * Tt, k * two_m:(k + 1) * two_m] = weight[k] @ cs
    fwc = np.zeros((batch * K * Tt, xw_width + hd_width))
    for b in range(batch):
        rows = slice(b * K * Tt, (b + 1) * K * Tt)
        fwc[rows, b * km:(b + 1) * km] = fw_xft
        fwc[rows, xw_width + b * Tt: xw_width + (b + 1) * Tt] = fw_fc
        fwc[rows, xw_width + batch * Tt + b * Tt: xw_width + batch * Tt + (b + 1) * Tt] = fw_bc

    # (c) Per-node complex-mix coefficients, out-channels pre-summed (the module sums
    #     them right after; irfft is linear), tiled along lanes for the batch blocks.
    wsr = w_re.sum(axis=2)                                     # (N, K, modes)
    wsi = w_im.sum(axis=2)
    a_re = np.concatenate([wsr, -wsi], axis=-1).reshape(N, km)
    a_im = np.concatenate([wsi, wsr], axis=-1).reshape(N, km)
    ari = np.concatenate([np.tile(a_re, (1, batch)),
                          np.tile(a_im, (1, batch))], axis=1)  # (N, 2*batch*km)

    # (d) Inverse rDFT (output bins 0..modes-1, Im of DC ignored as torch.fft.irfft does)
    #     composed with the folded heads, block-structured over batch.
    wi_pos = np.arange(modes, dtype=np.float64)
    ang_b = 2.0 * np.pi * np.outer(wi_pos, t) / L              # (modes, L)
    coef = np.where(wi_pos[:, None] == 0, 1.0 / L, 2.0 / L)
    icmat = coef * np.cos(ang_b)
    ismat = np.where(wi_pos[:, None] == 0, 0.0, -(2.0 / L) * np.sin(ang_b))
    icrep = np.tile(np.concatenate([icmat, icmat], axis=0), (K, 1))        # (km, L)
    isrep = np.tile(np.concatenate([ismat, ismat], axis=0), (K, 1))
    ic_fc_re, ic_bc_re = icrep @ w_fc, icrep @ wbc
    ic_fc_im, ic_bc_im = isrep @ w_fc, isrep @ wbc
    icb = np.zeros((2 * batch * km, hd_width))
    for b in range(batch):
        rre = slice(b * km, (b + 1) * km)
        rim = slice(batch * km + b * km, batch * km + (b + 1) * km)
        icb[rre, b * Tt:(b + 1) * Tt] = ic_fc_re
        icb[rre, batch * Tt + b * Tt: batch * Tt + (b + 1) * Tt] = ic_bc_re
        icb[rim, b * Tt:(b + 1) * Tt] = ic_fc_im
        icb[rim, batch * Tt + b * Tt: batch * Tt + (b + 1) * Tt] = ic_bc_im

    # (e) Head biases and the backcast_short_cut Linear, block-diag over batch.
    bias_all = np.concatenate([np.tile(b_fc, (1, batch)),
                               np.tile(bbc, (1, batch))], axis=1)          # (1, hd_width)
    wbs_bd = np.zeros((batch * Tt, batch * Tt))
    for b in range(batch):
        wbs_bd[b * Tt:(b + 1) * Tt, b * Tt:(b + 1) * Tt] = wbs
    bbs_w = np.tile(bbs, (1, batch))                                       # (1, batch*T)

    entries = [('fwc', fwc), ('ari', ari), ('icb', icb),
               ('wbs', wbs_bd), ('bias', bias_all), ('bbs', bbs_w)]
    width = max(int(np.asarray(a).shape[1]) for _, a in entries)
    return _pack_rows(entries, width)


# ----------------------------------------------------------------------------
# Fused forward-kernel factory
# ----------------------------------------------------------------------------
def build_forward(params, index, batch):
    K, Tt, L = params['weight'].shape
    N = params['w_re'].shape[0]
    modes = len(index)
    two_m = 2 * modes
    km = K * two_m
    xw_width = batch * km
    bt = batch * Tt

    slab_np, layout = _build_constant_slab(params, index, batch)
    slab = jnp.asarray(slab_np)                     # packed constant slab (~42 KiB)

    # Runtime-input slab layout (row offsets are multiples of 8 -> aligned slices).
    rt_specs = [('aml', N, K * N), ('xbd', K * N, batch * K * Tt), ('xln', N, bt)]
    rt_layout, off = {}, 0
    for name, r, c in rt_specs:
        rt_layout[name] = (off, r, c)
        off += -(-r // 8) * 8
    rt_rows = off
    rt_width = max(c for _, _, c in rt_specs)

    def kernel(rt_ref, slab_ref, out_ref):
        def ld(name):
            r0, nr, nc = layout[name]
            return slab_ref[r0:r0 + nr, 0:nc]       # static slice of the constant slab

        def ldr(name):
            r0, nr, nc = rt_layout[name]
            return rt_ref[r0:r0 + nr, 0:nc]         # static slice of the runtime slab

        a_ml = ldr('aml')                           # (N, K*N)     mul_L as (n, (k,m))
        xbd = ldr('xbd')                            # (K*N, B*K*T) x, k-block-diagonal
        x_ln = ldr('xln')                           # (N, B*T)     x as (n, (b,t))

        # Graph conv, all orders & batches in one MXU op; cols laid out as (b, k, t).
        gf = jnp.dot(a_ml, xbd, preferred_element_type=jnp.float32)        # (N, B*K*T)

        # Spectral weight + selected-mode forward rDFT + gw-part of BOTH linear heads,
        # all folded host-side into one constant -> one MXU op.
        r = jnp.dot(gf, ld('fwc'), preferred_element_type=jnp.float32)     # (N, xw+hd)
        xw = r[:, :xw_width]                        # [Re|Im] spectra, per (b, k, mode)

        # Per-node complex channel mix (out-channels pre-summed): one lane concat +
        # one elementwise multiply.
        p = jnp.concatenate([xw, xw], axis=1) * ld('ari')                  # (N, 2*xw)

        # Inverse rDFT folded with the heads -> new_x contribution to both heads.
        nh = jnp.dot(p, ld('icb'), preferred_element_type=jnp.float32)     # (N, hd)

        # Dropout(0.1): identity at inference.  series_decomp_multi([2]) with
        # attention_option='linear' is an exact identity: skipped.
        heads = r[:, xw_width:] + nh + ld('bias')   # [fc_b0..|bc_b0..] pre-activations
        fc = heads[:, :bt]
        bc = heads[:, bt:]

        # backcast_short_cut (independent of the chain above).
        bshort = jnp.dot(x_ln, ld('wbs'), preferred_element_type=jnp.float32) + ld('bbs')

        # Write heads directly into column slices of out_ref (no final concat tree).
        out_ref[:, 0:bt] = fc
        out_ref[:, bt:2 * bt] = jax.nn.sigmoid(bshort - bc)
        out_ref[:, 2 * bt:3 * bt] = jax.nn.sigmoid(bc)

    call = pl.pallas_call(
        kernel,
        out_shape=jax.ShapeDtypeStruct((N, 3 * bt), jnp.float32),
    )   # single grid-less invocation; everything resident in VMEM (<<64 MiB on v7x)

    eye_k = jnp.eye(K, dtype=jnp.float32)

    def forward(x, mul_L):
        # The constant slab bakes in `batch`; reject mismatched calls loudly.
        if tuple(x.shape) != (batch, 1, N, Tt):
            raise ValueError(f"expected x of shape {(batch, 1, N, Tt)}, got {x.shape}")
        if tuple(mul_L.shape) != (K, N, N):
            raise ValueError(f"expected mul_L of shape {(K, N, N)}, got {mul_L.shape}")

        xb = x[:, 0].astype(jnp.float32)                                    # (B, N, T)
        # All relayouts done once in XLA (cheap, <8 KiB), packed into ONE runtime slab.
        a_ml = jnp.transpose(mul_L.astype(jnp.float32), (1, 0, 2)).reshape(N, K * N)
        x_lanes = jnp.transpose(xb, (1, 0, 2)).reshape(N, bt)
        xbd = jnp.einsum('ij,bmt->imbjt', eye_k, xb).reshape(K * N, batch * K * Tt)

        rt = jnp.zeros((rt_rows, rt_width), jnp.float32)
        r0, _, c = rt_layout['aml']
        rt = rt.at[r0:r0 + N, :c].set(a_ml)
        r0, _, c = rt_layout['xbd']
        rt = rt.at[r0:r0 + K * N, :c].set(xbd)
        r0, _, c = rt_layout['xln']
        rt = rt.at[r0:r0 + N, :c].set(x_lanes)

        packed = call(rt, slab)                     # (N, 3*B*T), cols (head, b, t)
        out4 = packed.reshape(N, 3, batch, Tt)
        forecast = jnp.transpose(out4[:, 0], (1, 0, 2))                    # (B, N, T)
        backcast_source = jnp.transpose(out4[:, 1], (1, 0, 2))[:, None]    # (B, 1, N, T)
        x_back = jnp.transpose(out4[:, 2], (1, 0, 2))[:, None]             # (B, 1, N, T)
        return forecast, backcast_source, x_back

    return forward


# ----------------------------------------------------------------------------
# Plain-JAX reference (direct transcription of the torch forward, eval mode)
# ----------------------------------------------------------------------------
def reference_forward(x, mul_L, params, index):
    weight = params['weight']                                   # (K, T, MT)
    L = weight.shape[-1]
    xb = x[:, 0]                                                # (B, N, T)
    gf = jnp.einsum('knm,bmt->bknt', mul_L, xb)                 # (B, K, N, T)
    gw = jnp.einsum('bknt,ktl->bknl', gf, weight)               # (B, K, N, MT)
    q = jnp.transpose(gw, (0, 2, 1, 3))                         # (B, N, K, MT)
    x_ft = jnp.fft.rfft(q, axis=-1)
    w1 = params['w_re'] + 1j * params['w_im']                   # (N, K, K, modes)
    out_ft = jnp.zeros(q.shape[:3] + (L // 2 + 1,), jnp.complex64)
    for wi, i in enumerate(index):
        out_ft = out_ft.at[..., wi].set(
            jnp.einsum('bnk,nko->bno', x_ft[..., i], w1[..., wi]))
    new_x = jnp.transpose(jnp.fft.irfft(out_ft, n=L, axis=-1), (0, 2, 1, 3))
    # dropout = identity (eval); series_decomp_multi + attopt='linear' = identity.
    ig = jnp.sum(gw + new_x, axis=1)                            # (B, N, MT)
    fsrc = ig @ params['wf'] + params['bf']
    fcst = fsrc @ params['wfr'] + params['bfr']
    bcast = ig @ params['wbc'] + params['bbc']
    bshort = xb @ params['wbs'] + params['bbs']
    return (fcst,
            jax.nn.sigmoid(bshort - bcast)[:, None],
            jax.nn.sigmoid(bcast)[:, None])


if __name__ == "__main__":
    np.random.seed(0)   # deterministic random frequency-mode selection
    index = get_frequency_modes(T, modes=MODES, mode_select_method='random')

    key = jax.random.PRNGKey(0)
    kp, kx, kl = jax.random.split(key, 3)
    params = init_params(kp, index)

    x = jax.random.normal(kx, (B, 1, N_NODE, T), jnp.float32)
    mul_L = jax.random.normal(kl, (K_ORDER, N_NODE, N_NODE), jnp.float32) / N_NODE

    forward = build_forward(params, index, batch=B)
    fwd = jax.jit(forward)
    forecast, backcast_source, x_back = fwd(x, mul_L)
    jax.block_until_ready((forecast, backcast_source, x_back))

    assert forecast.shape == (B, N_NODE, T)
    assert backcast_source.shape == (B, 1, N_NODE, T)
    assert x_back.shape == (B, 1, N_NODE, T)

    # Validate against a plain-JAX transcription of the module (high-precision matmuls).
    with jax.default_matmul_precision('highest'):
        ref = reference_forward(x, mul_L, params, index)
    for got, want in zip((forecast, backcast_source, x_back), ref):
        np.testing.assert_allclose(np.asarray(got), np.asarray(want),
                                   rtol=2e-2, atol=2e-2)
    print("KERNEL_OK")
</pallas_src>

<mosaic_0001>
module attributes {stable_mosaic.version = 11 : i64} {
  func.func @kernel(%arg0: memref<48x64xf32, #tpu.memory_space<vmem>>, %arg1: memref<168x64xf32, #tpu.memory_space<vmem>>, %arg2: memref<8x48xf32, #tpu.memory_space<vmem>>) attributes {dimension_semantics = [], scalar_prefetch = 0 : i64, scratch_operands = 0 : i64, tpu.core_type = #tpu.core_type<tc>} {
    %c0 = arith.constant 0 : index
    %c0_0 = arith.constant 0 : index
    %0 = vector.load %arg0[%c0, %c0_0] : memref<48x64xf32, #tpu.memory_space<vmem>>, vector<8x32xf32>
    %c8 = arith.constant 8 : index
    %c0_1 = arith.constant 0 : index
    %1 = vector.load %arg0[%c8, %c0_1] : memref<48x64xf32, #tpu.memory_space<vmem>>, vector<32x64xf32>
    %c40 = arith.constant 40 : index
    %c0_2 = arith.constant 0 : index
    %2 = vector.load %arg0[%c40, %c0_2] : memref<48x64xf32, #tpu.memory_space<vmem>>, vector<8x16xf32>
    %cst = arith.constant dense<0.000000e+00> : vector<8x64xf32>
    %3 = tpu.matmul %0, %1, %cst {dimension_numbers = #tpu.dot_dimension_numbers<[1], [0], [0], [1], [0, 0, 1, 1], [], []>} : vector<8x32xf32>, vector<32x64xf32>, vector<8x64xf32> -> vector<8x64xf32>
    %c0_3 = arith.constant 0 : index
    %c0_4 = arith.constant 0 : index
    %4 = vector.load %arg1[%c0_3, %c0_4] : memref<168x64xf32, #tpu.memory_space<vmem>>, vector<64x64xf32>
    %cst_5 = arith.constant dense<0.000000e+00> : vector<8x64xf32>
    %5 = tpu.matmul %3, %4, %cst_5 {dimension_numbers = #tpu.dot_dimension_numbers<[1], [0], [0], [1], [0, 0, 1, 1], [], []>} : vector<8x64xf32>, vector<64x64xf32>, vector<8x64xf32> -> vector<8x64xf32>
    %6 = vector.extract_strided_slice %5 {offsets = [0, 0], sizes = [8, 32], strides = [1, 1]} : vector<8x64xf32> to vector<8x32xf32>
    %7 = tpu.concatenate %6, %6 in 1 : vector<8x32xf32>, vector<8x32xf32> -> vector<8x64xf32>
    %c64 = arith.constant 64 : index
    %c0_6 = arith.constant 0 : index
    %8 = vector.load %arg1[%c64, %c0_6] : memref<168x64xf32, #tpu.memory_space<vmem>>, vector<8x64xf32>
    %9 = arith.mulf %7, %8 : vector<8x64xf32>
    %c72 = arith.constant 72 : index
    %c0_7 = arith.constant 0 : index
    %10 = vector.load %arg1[%c72, %c0_7] : memref<168x64xf32, #tpu.memory_space<vmem>>, vector<64x32xf32>
    %cst_8 = arith.constant dense<0.000000e+00> : vector<8x32xf32>
    %11 = tpu.matmul %9, %10, %cst_8 {dimension_numbers = #tpu.dot_dimension_numbers<[1], [0], [0], [1], [0, 0, 1, 1], [], []>} : vector<8x64xf32>, vector<64x32xf32>, vector<8x32xf32> -> vector<8x32xf32>
    %12 = vector.extract_strided_slice %5 {offsets = [0, 32], sizes = [8, 32], strides = [1, 1]} : vector<8x64xf32> to vector<8x32xf32>
    %13 = arith.addf %12, %11 : vector<8x32xf32>
    %c152 = arith.constant 152 : index
    %c0_9 = arith.constant 0 : index
    %14 = vector.load %arg1[%c152, %c0_9] : memref<168x64xf32, #tpu.memory_space<vmem>>, vector<1x32xf32>
    %15 = vector.broadcast %14 : vector<1x32xf32> to vector<8x32xf32>
    %16 = arith.addf %13, %15 : vector<8x32xf32>
    %17 = vector.extract_strided_slice %16 {offsets = [0, 0], sizes = [8, 16], strides = [1, 1]} : vector<8x32xf32> to vector<8x16xf32>
    %18 = vector.extract_strided_slice %16 {offsets = [0, 16], sizes = [8, 16], strides = [1, 1]} : vector<8x32xf32> to vector<8x16xf32>
    %c136 = arith.constant 136 : index
    %c0_10 = arith.constant 0 : index
    %19 = vector.load %arg1[%c136, %c0_10] : memref<168x64xf32, #tpu.memory_space<vmem>>, vector<16x16xf32>
    %cst_11 = arith.constant dense<0.000000e+00> : vector<8x16xf32>
    %20 = tpu.matmul %2, %19, %cst_11 {dimension_numbers = #tpu.dot_dimension_numbers<[1], [0], [0], [1], [0, 0, 1, 1], [], []>} : vector<8x16xf32>, vector<16x16xf32>, vector<8x16xf32> -> vector<8x16xf32>
    %c160 = arith.constant 160 : index
    %c0_12 = arith.constant 0 : index
    %21 = vector.load %arg1[%c160, %c0_12] : memref<168x64xf32, #tpu.memory_space<vmem>>, vector<1x16xf32>
    %22 = vector.broadcast %21 : vector<1x16xf32> to vector<8x16xf32>
    %23 = arith.addf %20, %22 : vector<8x16xf32>
    %c0_13 = arith.constant 0 : index
    %c0_14 = arith.constant 0 : index
    %24 = vector.load %arg2[%c0_13, %c0_14] : memref<8x48xf32, #tpu.memory_space<vmem>>, vector<8x16xf32>
    tpu.vector_store %arg2[%c0_13, %c0_14], %17 {strides = array<i32>} : memref<8x48xf32, #tpu.memory_space<vmem>>, vector<8x16xf32>,
    %25 = arith.subf %23, %18 : vector<8x16xf32>
    %26 = arith.negf %25 : vector<8x16xf32>
    %27 = math.exp %26 : vector<8x16xf32>
    %cst_15 = arith.constant 1.000000e+00 : f32
    %28 = vector.broadcast %cst_15 : f32 to vector<8x16xf32>
    %29 = arith.addf %28, %27 : vector<8x16xf32>
    %30 = arith.divf %28, %29 : vector<8x16xf32>
    %c0_16 = arith.constant 0 : index
    %c16 = arith.constant 16 : index
    %31 = vector.load %arg2[%c0_16, %c16] : memref<8x48xf32, #tpu.memory_space<vmem>>, vector<8x16xf32>
    tpu.vector_store %arg2[%c0_16, %c16], %30 {strides = array<i32>} : memref<8x48xf32, #tpu.memory_space<vmem>>, vector<8x16xf32>,
    %32 = arith.negf %18 : vector<8x16xf32>
    %33 = math.exp %32 : vector<8x16xf32>
    %cst_17 = arith.constant 1.000000e+00 : f32
    %34 = vector.broadcast %cst_17 : f32 to vector<8x16xf32>
    %35 = arith.addf %34, %33 : vector<8x16xf32>
    %36 = arith.divf %34, %35 : vector<8x16xf32>
    %c0_18 = arith.constant 0 : index
    %c32 = arith.constant 32 : index
    %37 = vector.load %arg2[%c0_18, %c32] : memref<8x48xf32, #tpu.memory_space<vmem>>, vector<8x16xf32>
    tpu.vector_store %arg2[%c0_18, %c32], %36 {strides = array<i32>} : memref<8x48xf32, #tpu.memory_space<vmem>>, vector<8x16xf32>,
    return
  }
}

</mosaic_0001>

<llo_original>
// kernel: forward.1
$region0: #{forward.1}
  #allocation0 [shape = 'u32[]', space=smem, size = 0x4, offset = 0x4, fixed_abs, tag = 'smem constant byte address 0x4 - core index']
  #allocation1 [shape = 'u32[144,128]{1,0:T(1,128)}', space=vmem, size = 0x12000, scoped, tag = 'internal scratch']
  %s0 = inlined_call_operand.vmem [shape: f32[48,64], index: 0, kind: input, shape index: {}]
  %s1 = inlined_call_operand.vmem [shape: f32[168,64], index: 1, kind: input, shape index: {}]
  %s2 = inlined_call_operand.vmem [shape: f32[8,48], index: 2, kind: output, shape index: {}]
  %s3 = sld [smem:[#allocation0]]
  $region18: #{forward.1} parent=0
    _
  %s5 = ssub.s32 1, %s3
  %s6 = scalar_select 0, %s5, %s3
  // Predicated region
  $region2: #{forward.1} parent=0 // pred_check
    _
  $region3: #{forward.1} parent=0 // pred_check_branch
    %8 = sbr.rel (0) target = $region5
  $region4: #{forward.1} parent=0 // pred_region
    _
  $region5: #{forward.1} parent=0 // pred_fallthru
    _
  // Predicated region
  $region6: #{forward.1} parent=0 // pred_check
    _
  $region7: #{forward.1} parent=0 // pred_check_branch
    %10 = sbr.rel (0) target = $region9
  $region8: #{forward.1} parent=0 // pred_region
    _
  $region9: #{forward.1} parent=0 // pred_fallthru
    _
  %v11 = vld [vmem:[%s0] sm:$0xff]
  %v12 = vld [vmem:[%s0 + $0x8] sm:$0xff]
  %v13 = vld [vmem:[%s0 + $0x10] sm:$0xff]
  %v14 = vld [vmem:[%s0 + $0x18] sm:$0xff]
  %v15 = vld [vmem:[%s0 + $0x20] sm:$0xff]
  %v16 = vld [vmem:[%s0 + $0x28] sm:$0xff]
  %vm17 = vcmask 261120
  %v19 = vsel %vm17, %v11, 0
  %21 = vmatprep.subr.mxu0 0.0
  %22 = vmatpush1.msra.mxu0 %v12
  %23 = vmatprep.subr.mxu0 0.0
  %24 = vmatpush1.msra.mxu0 %v13
  %25 = vmatprep.subr.mxu0 0.0
  %26 = vmatpush1.msra.mxu0 %v14
  %27 = vmatprep.subr.mxu0 0.0
  %28 = vmatpush1.msra.mxu0 %v15
  %29 = vmatprep.subr.mxu0 0.0
  %30 = vmatpush1.msra.mxu0 0.0
  %31 = vmatprep.subr.mxu0 0.0
  %32 = vmatpush1.msra.mxu0 0.0
  %33 = vmatprep.subr.mxu0 0.0
  %34 = vmatpush1.msra.mxu0 0.0
  %35 = vmatprep.subr.mxu0 0.0
  %36 = vmatpush1.msra.mxu0 0.0
  %37 = vmatprep.subr.mxu0 0.0
  %38 = vmatpush1.msra.mxu0 0.0
  %39 = vmatprep.subr.mxu0 0.0
  %40 = vmatpush1.msra.mxu0 0.0
  %41 = vmatprep.subr.mxu0 0.0
  %42 = vmatpush1.msra.mxu0 0.0
  %43 = vmatprep.subr.mxu0 0.0
  %44 = vmatpush1.msra.mxu0 0.0
  %45 = vmatprep.subr.mxu0 0.0
  %46 = vmatpush1.msra.mxu0 0.0
  %47 = vmatprep.subr.mxu0 0.0
  %48 = vmatpush1.msra.mxu0 0.0
  %49 = vmatprep.subr.mxu0 0.0
  %50 = vmatpush1.msra.mxu0 0.0
  %51 = vmatprep.subr.mxu0 0.0
  %52 = vmatpush1.msra.mxu0 0.0
  %53 = vmatprep.subr.mxu0 0.0
  %54 = vmatpush1.msra.mxu0 0.0
  %55 = vmatprep.subr.mxu0 0.0
  %56 = vmatpush1.msra.mxu0 0.0
  %57 = vmatprep.subr.mxu0 0.0
  %58 = vmatpush1.msra.mxu0 0.0
  %59 = vmatprep.subr.mxu0 0.0
  %60 = vmatpush1.msra.mxu0 0.0
  %61 = vmatprep.subr.mxu0 0.0
  %62 = vmatpush1.msra.mxu0 0.0
  %63 = vmatprep.subr.mxu0 0.0
  %64 = vmatpush1.msra.mxu0 0.0
  %65 = vmatprep.subr.mxu0 0.0
  %66 = vmatpush1.msra.mxu0 0.0
  %67 = vmatprep.subr.mxu0 0.0
  %68 = vmatpush1.msra.mxu0 0.0
  %69 = vmatprep.subr.mxu0 0.0
  %70 = vmatpush1.msra.mxu0 0.0
  %71 = vmatprep.subr.mxu0 0.0
  %72 = vmatpush1.msra.mxu0 0.0
  %73 = vmatprep.subr.mxu0 0.0
  %74 = vmatpush1.msra.mxu0 0.0
  %75 = vmatprep.subr.mxu0 0.0
  %76 = vmatpush1.msra.mxu0 0.0
  %77 = vmatprep.subr.mxu0 0.0
  %78 = vmatpush1.msra.mxu0 0.0
  %79 = vmatprep.subr.mxu0 0.0
  %80 = vmatpush1.msra.mxu0 0.0
  %81 = vmatprep.subr.mxu0 0.0
  %82 = vmatpush1.msra.mxu0 0.0
  %83 = vmatprep.subr.mxu0 0.0
  %84 = vmatpush1.msra.mxu0 0.0
  %85 = vmatprep.mubr.f32.mxu0 0.0
  %86 = vmatmul.mubr.f32.gmra.mrb[0].mxu0 %v19
  %v87 = vpop.f32.mrb[0].mxu0
  %v88 = vadd.f32 0.0, %v87
  %v89 = vpop.f32.mrb[0].mxu0
  %90 = vdwg.mxu0
  %v91 = vld [vmem:[%s1] sm:$0xff]
  %v92 = vld [vmem:[%s1 + $0x8] sm:$0xff]
  %v93 = vld [vmem:[%s1 + $0x10] sm:$0xff]
  %v94 = vld [vmem:[%s1 + $0x18] sm:$0xff]
  %v95 = vld [vmem:[%s1 + $0x20] sm:$0xff]
  %v96 = vld [vmem:[%s1 + $0x28] sm:$0xff]
  %v97 = vld [vmem:[%s1 + $0x30] sm:$0xff]
  %v98 = vld [vmem:[%s1 + $0x38] sm:$0xff]
  %vm99 = vcmask 523264
  %v101 = vsel %vm99, %v88, 0
  %103 = vmatprep.subr.mxu0 0.0
  %104 = vmatpush1.msra.mxu0 %v91
  %105 = vmatprep.subr.mxu0 0.0
  %106 = vmatpush1.msra.mxu0 %v92
  %107 = vmatprep.subr.mxu0 0.0
  %108 = vmatpush1.msra.mxu0 %v93
  %109 = vmatprep.subr.mxu0 0.0
  %110 = vmatpush1.msra.mxu0 %v94
  %111 = vmatprep.subr.mxu0 0.0
  %112 = vmatpush1.msra.mxu0 %v95
  %113 = vmatprep.subr.mxu0 0.0
  %114 = vmatpush1.msra.mxu0 %v96
  %115 = vmatprep.subr.mxu0 0.0
  %116 = vmatpush1.msra.mxu0 %v97
  %117 = vmatprep.subr.mxu0 0.0
  %118 = vmatpush1.msra.mxu0 %v98
  %119 = vmatprep.subr.mxu0 0.0
  %120 = vmatpush1.msra.mxu0 0.0
  %121 = vmatprep.subr.mxu0 0.0
  %122 = vmatpush1.msra.mxu0 0.0
  %123 = vmatprep.subr.mxu0 0.0
  %124 = vmatpush1.msra.mxu0 0.0
  %125 = vmatprep.subr.mxu0 0.0
  %126 = vmatpush1.msra.mxu0 0.0
  %127 = vmatprep.subr.mxu0 0.0
  %128 = vmatpush1.msra.mxu0 0.0
  %129 = vmatprep.subr.mxu0 0.0
  %130 = vmatpush1.msra.mxu0 0.0
  %131 = vmatprep.subr.mxu0 0.0
  %132 = vmatpush1.msra.mxu0 0.0
  %133 = vmatprep.subr.mxu0 0.0
  %134 = vmatpush1.msra.mxu0 0.0
  %135 = vmatprep.subr.mxu0 0.0
  %136 = vmatpush1.msra.mxu0 0.0
  %137 = vmatprep.subr.mxu0 0.0
  %138 = vmatpush1.msra.mxu0 0.0
  %139 = vmatprep.subr.mxu0 0.0
  %140 = vmatpush1.msra.mxu0 0.0
  %141 = vmatprep.subr.mxu0 0.0
  %142 = vmatpush1.msra.mxu0 0.0
  %143 = vmatprep.subr.mxu0 0.0
  %144 = vmatpush1.msra.mxu0 0.0
  %145 = vmatprep.subr.mxu0 0.0
  %146 = vmatpush1.msra.mxu0 0.0
  %147 = vmatprep.subr.mxu0 0.0
  %148 = vmatpush1.msra.mxu0 0.0
  %149 = vmatprep.subr.mxu0 0.0
  %150 = vmatpush1.msra.mxu0 0.0
  %151 = vmatprep.subr.mxu0 0.0
  %152 = vmatpush1.msra.mxu0 0.0
  %153 = vmatprep.subr.mxu0 0.0
  %154 = vmatpush1.msra.mxu0 0.0
  %155 = vmatprep.subr.mxu0 0.0
  %156 = vmatpush1.msra.mxu0 0.0
  %157 = vmatprep.subr.mxu0 0.0
  %158 = vmatpush1.msra.mxu0 0.0
  %159 = vmatprep.subr.mxu0 0.0
  %160 = vmatpush1.msra.mxu0 0.0
  %161 = vmatprep.subr.mxu0 0.0
  %162 = vmatpush1.msra.mxu0 0.0
  %163 = vmatprep.subr.mxu0 0.0
  %164 = vmatpush1.msra.mxu0 0.0
  %165 = vmatprep.subr.mxu0 0.0
  %166 = vmatpush1.msra.mxu0 0.0
  %167 = vmatprep.mubr.f32.mxu0 0.0
  %168 = vmatmul.mubr.f32.gmra.mrb[0].mxu0 %v101
  %v169 = vpop.f32.mrb[0].mxu0
  %v170 = vadd.f32 0.0, %v169
  %v171 = vpop.f32.mrb[0].mxu0
  %172 = vdwg.mxu0
  %174 = vrot.lane.b32.xlu0 %v170, 32
  %v175 = vpop.permute.xlu0 %174
  %v177 = vsel %vm17, %v170, %v175
  %v178 = vld [vmem:[%s1 + $0x40] sm:$0xff]
  %v179 = vmul.f32 %v177, %v178
  %v180 = vld [vmem:[%s1 + $0x48] sm:$0xff]
  %v181 = vld [vmem:[%s1 + $0x50] sm:$0xff]
  %v182 = vld [vmem:[%s1 + $0x58] sm:$0xff]
  %v183 = vld [vmem:[%s1 + $0x60] sm:$0xff]
  %v184 = vld [vmem:[%s1 + $0x68] sm:$0xff]
  %v185 = vld [vmem:[%s1 + $0x70] sm:$0xff]
  %v186 = vld [vmem:[%s1 + $0x78] sm:$0xff]
  %v187 = vld [vmem:[%s1 + $0x80] sm:$0xff]
  %v189 = vsel %vm99, %v179, 0
  %191 = vmatprep.subr.mxu0 0.0
  %192 = vmatpush1.msra.mxu0 %v180
  %193 = vmatprep.subr.mxu0 0.0
  %194 = vmatpush1.msra.mxu0 %v181
  %195 = vmatprep.subr.mxu0 0.0
  %196 = vmatpush1.msra.mxu0 %v182
  %197 = vmatprep.subr.mxu0 0.0
  %198 = vmatpush1.msra.mxu0 %v183
  %199 = vmatprep.subr.mxu0 0.0
  %200 = vmatpush1.msra.mxu0 %v184
  %201 = vmatprep.subr.mxu0 0.0
  %202 = vmatpush1.msra.mxu0 %v185
  %203 = vmatprep.subr.mxu0 0.0
  %204 = vmatpush1.msra.mxu0 %v186
  %205 = vmatprep.subr.mxu0 0.0
  %206 = vmatpush1.msra.mxu0 %v187
  %207 = vmatprep.subr.mxu0 0.0
  %208 = vmatpush1.msra.mxu0 0.0
  %209 = vmatprep.subr.mxu0 0.0
  %210 = vmatpush1.msra.mxu0 0.0
  %211 = vmatprep.subr.mxu0 0.0
  %212 = vmatpush1.msra.mxu0 0.0
  %213 = vmatprep.subr.mxu0 0.0
  %214 = vmatpush1.msra.mxu0 0.0
  %215 = vmatprep.subr.mxu0 0.0
  %216 = vmatpush1.msra.mxu0 0.0
  %217 = vmatprep.subr.mxu0 0.0
  %218 = vmatpush1.msra.mxu0 0.0
  %219 = vmatprep.subr.mxu0 0.0
  %220 = vmatpush1.msra.mxu0 0.0
  %221 = vmatprep.subr.mxu0 0.0
  %222 = vmatpush1.msra.mxu0 0.0
  %223 = vmatprep.subr.mxu0 0.0
  %224 = vmatpush1.msra.mxu0 0.0
  %225 = vmatprep.subr.mxu0 0.0
  %226 = vmatpush1.msra.mxu0 0.0
  %227 = vmatprep.subr.mxu0 0.0
  %228 = vmatpush1.msra.mxu0 0.0
  %229 = vmatprep.subr.mxu0 0.0
  %230 = vmatpush1.msra.mxu0 0.0
  %231 = vmatprep.subr.mxu0 0.0
  %232 = vmatpush1.msra.mxu0 0.0
  %233 = vmatprep.subr.mxu0 0.0
  %234 = vmatpush1.msra.mxu0 0.0
  %235 = vmatprep.subr.mxu0 0.0
  %236 = vmatpush1.msra.mxu0 0.0
  %237 = vmatprep.subr.mxu0 0.0
  %238 = vmatpush1.msra.mxu0 0.0
  %239 = vmatprep.subr.mxu0 0.0
  %240 = vmatpush1.msra.mxu0 0.0
  %241 = vmatprep.subr.mxu0 0.0
  %242 = vmatpush1.msra.mxu0 0.0
  %243 = vmatprep.subr.mxu0 0.0
  %244 = vmatpush1.msra.mxu0 0.0
  %245 = vmatprep.subr.mxu0 0.0
  %246 = vmatpush1.msra.mxu0 0.0
  %247 = vmatprep.subr.mxu0 0.0
  %248 = vmatpush1.msra.mxu0 0.0
  %249 = vmatprep.subr.mxu0 0.0
  %250 = vmatpush1.msra.mxu0 0.0
  %251 = vmatprep.subr.mxu0 0.0
  %252 = vmatpush1.msra.mxu0 0.0
  %253 = vmatprep.subr.mxu0 0.0
  %254 = vmatpush1.msra.mxu0 0.0
  %255 = vmatprep.mubr.f32.mxu0 0.0
  %256 = vmatmul.mubr.f32.gmra.mrb[0].mxu0 %v189
  %v257 = vpop.f32.mrb[0].mxu0
  %v258 = vadd.f32 0.0, %v257
  %v259 = vpop.f32.mrb[0].mxu0
  %260 = vdwg.mxu0
  %262 = vrot.lane.b32.xlu0 %v258, 32
  %v263 = vpop.permute.xlu0 %262
  %v265 = vadd.f32 %v170, %v263
  %v266 = vld [vmem:[%s1 + $0x98] sm:$0x1]
  %v267 = vlaneseq
  %v268 = vshrl.u32 %v267, 7
  %v269 = vsub.s32 0, %v268
  %v270 = vrot.slane %v266, %v269
  %272 = vrot.lane.b32.xlu0 %v270, 32
  %v273 = vpop.permute.xlu0 %272
  %v275 = vadd.f32 %v265, %v273
  %v276 = vld [vmem:[%s1 + $0x88] sm:$0xff]
  %v277 = vld [vmem:[%s1 + $0x90] sm:$0xff]
  %v278 = vld [vmem:[%s1 + $0xa0] sm:$0x1]
  %v279 = vlaneseq
  %v280 = vshrl.u32 %v279, 7
  %v281 = vsub.s32 0, %v280
  %v282 = vrot.slane %v278, %v281
  %vm283 = vcmask 130048
  %v285 = vsel %vm283, %v16, 0
  %287 = vmatprep.subr.mxu0 0.0
  %288 = vmatpush1.msra.mxu0 %v276
  %289 = vmatprep.subr.mxu0 0.0
  %290 = vmatpush1.msra.mxu0 %v277
  %291 = vmatprep.subr.mxu0 0.0
  %292 = vmatpush1.msra.mxu0 0.0
  %293 = vmatprep.subr.mxu0 0.0
  %294 = vmatpush1.msra.mxu0 0.0
  %295 = vmatprep.subr.mxu0 0.0
  %296 = vmatpush1.msra.mxu0 0.0
  %297 = vmatprep.subr.mxu0 0.0
  %298 = vmatpush1.msra.mxu0 0.0
  %299 = vmatprep.subr.mxu0 0.0
  %300 = vmatpush1.msra.mxu0 0.0
  %301 = vmatprep.subr.mxu0 0.0
  %302 = vmatpush1.msra.mxu0 0.0
  %303 = vmatprep.subr.mxu0 0.0
  %304 = vmatpush1.msra.mxu0 0.0
  %305 = vmatprep.subr.mxu0 0.0
  %306 = vmatpush1.msra.mxu0 0.0
  %307 = vmatprep.subr.mxu0 0.0
  %308 = vmatpush1.msra.mxu0 0.0
  %309 = vmatprep.subr.mxu0 0.0
  %310 = vmatpush1.msra.mxu0 0.0
  %311 = vmatprep.subr.mxu0 0.0
  %312 = vmatpush1.msra.mxu0 0.0
  %313 = vmatprep.subr.mxu0 0.0
  %314 = vmatpush1.msra.mxu0 0.0
  %315 = vmatprep.subr.mxu0 0.0
  %316 = vmatpush1.msra.mxu0 0.0
  %317 = vmatprep.subr.mxu0 0.0
  %318 = vmatpush1.msra.mxu0 0.0
  %319 = vmatprep.subr.mxu0 0.0
  %320 = vmatpush1.msra.mxu0 0.0
  %321 = vmatprep.subr.mxu0 0.0
  %322 = vmatpush1.msra.mxu0 0.0
  %323 = vmatprep.subr.mxu0 0.0
  %324 = vmatpush1.msra.mxu0 0.0
  %325 = vmatprep.subr.mxu0 0.0
  %326 = vmatpush1.msra.mxu0 0.0
  %327 = vmatprep.subr.mxu0 0.0
  %328 = vmatpush1.msra.mxu0 0.0
  %329 = vmatprep.subr.mxu0 0.0
  %330 = vmatpush1.msra.mxu0 0.0
  %331 = vmatprep.subr.mxu0 0.0
  %332 = vmatpush1.msra.mxu0 0.0
  %333 = vmatprep.subr.mxu0 0.0
  %334 = vmatpush1.msra.mxu0 0.0
  %335 = vmatprep.subr.mxu0 0.0
  %336 = vmatpush1.msra.mxu0 0.0
  %337 = vmatprep.subr.mxu0 0.0
  %338 = vmatpush1.msra.mxu0 0.0
  %339 = vmatprep.subr.mxu0 0.0
  %340 = vmatpush1.msra.mxu0 0.0
  %341 = vmatprep.subr.mxu0 0.0
  %342 = vmatpush1.msra.mxu0 0.0
  %343 = vmatprep.subr.mxu0 0.0
  %344 = vmatpush1.msra.mxu0 0.0
  %345 = vmatprep.subr.mxu0 0.0
  %346 = vmatpush1.msra.mxu0 0.0
  %347 = vmatprep.subr.mxu0 0.0
  %348 = vmatpush1.msra.mxu0 0.0
  %349 = vmatprep.subr.mxu0 0.0
  %350 = vmatpush1.msra.mxu0 0.0
  %351 = vmatprep.mubr.f32.mxu0 0.0
  %352 = vmatmul.mubr.f32.gmra.mrb[0].mxu0 %v285
  %v353 = vpop.f32.mrb[0].mxu0
  %v354 = vadd.f32 %v282, %v353
  %v355 = vpop.f32.mrb[0].mxu0
  %356 = vdwg.mxu0
  %358 = vrot.lane.b32.xlu0 %v275, 96
  %v359 = vpop.permute.xlu0 %358
  %361 = vst.msk [vmem:[%s2] sm:$0xff] %vm283, %v359
  %362 = vrot.lane.b32.xlu0 %v275, 80
  %v363 = vpop.permute.xlu0 %362
  %v365 = vsub.f32 %v354, %v363
  %v366 = vxor.u32 %v365, 2147483648
  %v367 = vmul.f32 %v366, 1.442695
  %v368 = vpow.pop %v367
  %v369 = vadd.f32 %v368, 1.0
  %v370 = vrcp.pop %v369
  %v371 = vmul.f32 1.0, %v370
  %373 = vrot.lane.b32.xlu0 %v371, 16
  %v374 = vpop.permute.xlu0 %373
  %vm376 = vcmask 261248
  %377 = vst.msk [vmem:[%s2] sm:$0xff] %vm376, %v374
  %v378 = vxor.u32 %v275, 2147483648
  %v379 = vmul.f32 %v378, 1.442695
  %v380 = vpow.pop %v379
  %v381 = vadd.f32 %v380, 1.0
  %v382 = vrcp.pop %v381
  %v383 = vmul.f32 1.0, %v382
  %385 = vrot.lane.b32.xlu0 %v383, 112
  %v386 = vpop.permute.xlu0 %385
  %vm388 = vcmask 392448
  %389 = vst.msk [vmem:[%s2] sm:$0xff] %vm388, %v386
  // Predicated region
  $region10: #{forward.1} parent=0 // pred_check
    _
  $region11: #{forward.1} parent=0 // pred_check_branch
    %391 = sbr.rel (0) target = $region13
  $region12: #{forward.1} parent=0 // pred_region
    _
  $region13: #{forward.1} parent=0 // pred_fallthru
    _
  // Predicated region
  $region14: #{forward.1} parent=0 // pred_check
    _
  $region15: #{forward.1} parent=0 // pred_check_branch
    %393 = sbr.rel (0) target = $region17
  $region16: #{forward.1} parent=0 // pred_region
    _
  $region17: #{forward.1} parent=0 // pred_fallthru
    _

</llo_original>
